<compile_context>
chip_gen: v7x
topology: tpu7x:2x2x1
jax: 0.10.0
libtpu: 0.0.40
codegen_flags: <defaults>
</compile_context>

<pallas_src>
import math
import functools

import jax
import jax.numpy as jnp
from jax import lax
from jax.experimental import pallas as pl
from jax.experimental.pallas import tpu as pltpu

LANES = 128


def round_value(value, scale):
    return int(math.ceil(value * scale))


def _pad_to_lanes(c):
    return ((c + LANES - 1) // LANES) * LANES


def _choose_batch_block(n, l_first, target_rows=256):
    """Largest divisor of n with B_blk*l_first ~ target MXU M rows; keep >=2
    grid steps (v7x dual TensorCore) when that still leaves M >= 128."""
    want = max(1, -(-target_rows // l_first))
    divisors = [d for d in range(1, n + 1) if n % d == 0]
    b = max(d for d in divisors if d <= want)
    if b == n and n > 1:
        half = max(d for d in divisors if d <= n // 2)
        if half * l_first >= 128:
            b = half
    return b


# ---------------------------------------------------------------------------
# Fused kernel: one grid step = B_blk batch elements through all layers.
#   refs (positional, as delivered by pallas_call):
#     [0]                x_ref   (B_blk, L0, cin0)        raw (unpadded) input
#     [1 .. 2*depth]     per layer: w_ref (K, cin_l, C_pad)   BN-scale-folded
#                                   bias_ref (1, C_pad)       BN-shift-folded
#     [1+2*depth]        o_ref   (B_blk, L_final, width)  real channels only
#     scratch:           xp_ref  (B_blk, L0+2P, cin0)     padded input slab
#                        act_a/act_b (B_blk, L_mid+2P, C_pad)  ping-pong acts
#   layer_dims: static tuple of (stride, cin, L_out) per layer.
# ---------------------------------------------------------------------------
def fused_cnn_kernel(*refs, K, P, L0, B_blk, layer_dims):
    depth = len(layer_dims)
    x_ref = refs[0]
    params = refs[1:1 + 2 * depth]
    o_ref = refs[1 + 2 * depth]
    xp_ref, act_a, act_b = refs[2 + 2 * depth:5 + 2 * depth]

    cin0 = layer_dims[0][1]
    width = o_ref.shape[-1]
    C_pad = act_a.shape[-1]

    # ---- halo-only zeroing (interiors are fully overwritten every step) ----
    if P > 0:
        zeros_in = jnp.zeros((B_blk, P, cin0), jnp.float32)
        xp_ref[:, 0:P, :] = zeros_in
        xp_ref[:, P + L0:P + L0 + P, :] = zeros_in

    # in-kernel "same" padding: raw input into the interior of the VMEM slab
    xp_ref[:, P:P + L0, :] = x_ref[...]

    act_bufs = (act_a, act_b)
    halo_done = set()
    src_ref = xp_ref
    for l, (stride, cin, L_out) in enumerate(layer_dims):
        w_ref = params[2 * l]        # (K, cin, C_pad), BN scale folded in
        b_ref = params[2 * l + 1]    # (1, C_pad),      BN shift folded in

        M = B_blk * L_out
        acc = None
        # K accumulating dots (no im2col concat): same MXU pass count,
        # fewer lane copies and lower vreg pressure.
        for k in range(K):
            if stride == 1:
                lhs = src_ref[:, k:k + L_out, :]
            else:
                # strided sublane read = direct stride-s output (no overcompute)
                lhs = src_ref[:, pl.ds(k, L_out, stride=stride), :]
            # (B_blk, L_out, cin) -> (B_blk*L_out, cin); free when L_out % 8 == 0
            lhs2 = lhs.reshape(M, cin)
            # TODO(synk): cast lhs2/w to bf16 on v6e/v7x once validated vs 1e-4 tol.
            d = jnp.dot(lhs2, w_ref[k], preferred_element_type=jnp.float32)
            acc = d if acc is None else acc + d

        y = jnp.maximum(acc + b_ref[...], 0.0)           # folded BN + ReLU
        y3 = y.reshape(B_blk, L_out, C_pad)

        if l == depth - 1:
            # emit only the real channels -> width/128 of the padded HBM traffic
            o_ref[...] = y3[:, :, :width].astype(o_ref.dtype)
        else:
            dst = act_bufs[l % 2]
            if P > 0 and (l % 2) not in halo_done:
                zeros_act = jnp.zeros((B_blk, P, C_pad), jnp.float32)
                dst[:, 0:P, :] = zeros_act
                dst[:, P + L_out:P + L_out + P, :] = zeros_act
                halo_done.add(l % 2)
            dst[:, P:P + L_out, :] = y3                  # stays in VMEM
            src_ref = dst


def fused_cnn_pallas(x_nlc, layers, K, L_final, width, C_pad):
    """x_nlc: (N, L0, cin0); layers: list of (w, bias, stride, cin_k, L_out)."""
    N, L0, cin0 = x_nlc.shape
    P = K // 2
    l_first = layers[0][4]
    B_blk = _choose_batch_block(N, l_first)
    L_mid = l_first   # all layers after the first are stride-1 -> constant length

    layer_dims = tuple((l[2], l[3], l[4]) for l in layers)
    kernel = functools.partial(fused_cnn_kernel, K=K, P=P, L0=L0,
                               B_blk=B_blk, layer_dims=layer_dims)

    in_specs = [pl.BlockSpec((B_blk, L0, cin0), lambda n: (n, 0, 0))]
    operands = [x_nlc]
    for (w, b, _s, _cin, _L) in layers:
        in_specs += [
            pl.BlockSpec(w.shape, lambda n: (0, 0, 0)),
            pl.BlockSpec(b.shape, lambda n: (0, 0)),
        ]
        operands += [w, b]

    scratch_shapes = [
        pltpu.VMEM((B_blk, L0 + 2 * P, cin0), jnp.float32),      # padded input
        pltpu.VMEM((B_blk, L_mid + 2 * P, C_pad), jnp.float32),  # activation ping
        pltpu.VMEM((B_blk, L_mid + 2 * P, C_pad), jnp.float32),  # activation pong
    ]

    # explicit VMEM budget (double-buffered IO + weights + scratch), with margin,
    # capped well under v7x's 64 MiB physical VMEM.
    io_bytes = 2 * (B_blk * L0 * cin0 + B_blk * L_final * width) * 4
    w_bytes = sum(int(w.size) + int(b.size) for (w, b, *_rest) in layers) * 4
    scratch_bytes = 4 * (B_blk * (L0 + 2 * P) * cin0
                         + 2 * B_blk * (L_mid + 2 * P) * C_pad)
    vmem_limit = int(min(32 * 1024 * 1024,
                         max(8 * 1024 * 1024,
                             4 * (io_bytes + w_bytes + scratch_bytes))))

    return pl.pallas_call(
        kernel,
        out_shape=jax.ShapeDtypeStruct((N, L_final, width), x_nlc.dtype),
        grid=(N // B_blk,),
        in_specs=in_specs,
        out_specs=pl.BlockSpec((B_blk, L_final, width), lambda n: (n, 0, 0)),
        scratch_shapes=scratch_shapes,
        compiler_params=pltpu.CompilerParams(
            dimension_semantics=("parallel",),
            vmem_limit_bytes=vmem_limit),
    )(*operands)


# ---------------------------------------------------------------------------
# CNNmodule re-implementation with deterministic parameter init.
# BatchNorm in eval mode (running stats), folded into the conv weights/bias.
# ---------------------------------------------------------------------------
class CNNModulePallas:
    def __init__(self, key, in_channel, out_channel, kernel_size,
                 depth_scale, width_scale, initial=False):
        depth = round_value(2, depth_scale)
        width = round_value(out_channel, width_scale)
        first_in = in_channel if initial else round_value(in_channel, width_scale)

        cins = [first_in] + [width] * (depth - 1)
        strides = [2] + [1] * (depth - 1)
        eps = 1e-5

        self.K = kernel_size
        self.width = width
        self.C_pad = _pad_to_lanes(width)
        self.strides = strides
        self.params = []   # (w_packed, bias_packed, stride, cin_kernel)
        self.raw = []      # raw params for the pure-JAX reference check

        for idx, (cin, s) in enumerate(zip(cins, strides)):
            key, kw, kb, kg, kbe, km, kv = jax.random.split(key, 7)
            fan_in = cin * kernel_size
            bound = 1.0 / math.sqrt(fan_in)
            # PyTorch Conv1d layout (C_out, C_in, K)
            w_t = jax.random.uniform(kw, (width, cin, kernel_size),
                                     jnp.float32, -bound, bound)
            b_conv = jax.random.uniform(kb, (width,), jnp.float32, -bound, bound)
            gamma = 1.0 + 0.1 * jax.random.normal(kg, (width,), jnp.float32)
            beta = 0.1 * jax.random.normal(kbe, (width,), jnp.float32)
            r_mean = 0.1 * jax.random.normal(km, (width,), jnp.float32)
            r_var = 1.0 + 0.5 * jax.random.uniform(kv, (width,), jnp.float32)

            scale = gamma / jnp.sqrt(r_var + eps)                 # (C_out,)
            bias = beta + scale * (b_conv - r_mean)               # (C_out,)

            # Layers >=1 read from the C_pad-lane activation buffer, so their
            # contraction dim is padded to C_pad (zero rows); layer 0 keeps the
            # raw cin (shallow contraction is still a single MXU pass).
            cin_k = cin if idx == 0 else self.C_pad
            w_kic = jnp.transpose(w_t, (2, 1, 0)) * scale[None, None, :]  # fold BN scale
            w_packed = jnp.zeros((kernel_size, cin_k, self.C_pad), jnp.float32)
            w_packed = w_packed.at[:, :cin, :width].set(w_kic)
            bias_packed = jnp.zeros((1, self.C_pad), jnp.float32).at[0, :width].set(bias)

            self.params.append((w_packed, bias_packed, s, cin_k))
            self.raw.append((w_t, b_conv, gamma, beta, r_mean, r_var, s, eps))

    def __call__(self, x_ncl):
        N, C, L = x_ncl.shape
        P = self.K // 2
        lengths = []
        Lc = L
        for s in self.strides:                        # static per-layer lengths
            Lc = (Lc + 2 * P - self.K) // s + 1
            lengths.append(Lc)

        layers = [p + (lengths[i],) for i, p in enumerate(self.params)]
        x_nlc = jnp.transpose(x_ncl, (0, 2, 1))       # NCL -> NLC
        out_nlw = fused_cnn_pallas(x_nlc, layers, self.K, lengths[-1],
                                   self.width, self.C_pad)
        return jnp.transpose(out_nlw, (0, 2, 1))      # NLC -> NCL (no slice needed)

    def reference(self, x_ncl):
        """Pure-JAX reference (eval-mode BN) for correctness checking."""
        x = x_ncl
        for (w_t, b_conv, gamma, beta, r_mean, r_var, s, eps) in self.raw:
            K = w_t.shape[-1]
            P = K // 2
            y = lax.conv_general_dilated(
                x, w_t, window_strides=(s,), padding=[(P, P)],
                dimension_numbers=("NCH", "OIH", "NCH"))
            y = y + b_conv[None, :, None]
            y = (y - r_mean[None, :, None]) / jnp.sqrt(r_var[None, :, None] + eps)
            y = gamma[None, :, None] * y + beta[None, :, None]
            x = jnp.maximum(y, 0.0)
        return x


if __name__ == "__main__":
    key = jax.random.PRNGKey(0)
    kp, kx = jax.random.split(key)

    # CNNmodule(in_channel=4, out_channel=8, kernel_size=3,
    #           depth_scale=1.0, width_scale=1.0, initial=True)
    # -> depth=2, width=8: ConvBnRelu(4->8, s=2) + ConvBnRelu(8->8, s=1)
    module = CNNModulePallas(kp, in_channel=4, out_channel=8, kernel_size=3,
                             depth_scale=1.0, width_scale=1.0, initial=True)

    x = jax.random.normal(kx, (2, 4, 16), dtype=jnp.float32)  # (N, C_in, L)

    out = jax.block_until_ready(module(x))
    ref = module.reference(x)

    assert out.shape == ref.shape == (2, 8, 8), (out.shape, ref.shape)
    assert jnp.allclose(out, ref, atol=1e-4, rtol=1e-4), float(
        jnp.max(jnp.abs(out - ref)))

    print("KERNEL_OK")
</pallas_src>

<mosaic_0001>
module attributes {stable_mosaic.version = 11 : i64} {
  func.func @fused_cnn_kernel(%arg0: i32, %arg1: memref<2x16x4xf32, #tpu.memory_space<vmem>>, %arg2: memref<3x4x128xf32, #tpu.memory_space<vmem>>, %arg3: memref<1x128xf32, #tpu.memory_space<vmem>>, %arg4: memref<3x128x128xf32, #tpu.memory_space<vmem>>, %arg5: memref<1x128xf32, #tpu.memory_space<vmem>>, %arg6: memref<2x8x8xf32, #tpu.memory_space<vmem>>, %arg7: memref<2x18x4xf32, #tpu.memory_space<vmem>>, %arg8: memref<2x10x128xf32, #tpu.memory_space<vmem>>, %arg9: memref<2x10x128xf32, #tpu.memory_space<vmem>>) attributes {dimension_semantics = [#tpu.dimension_semantics<parallel>], iteration_bounds = array<i64: 1>, scalar_prefetch = 0 : i64, scratch_operands = 3 : i64, tpu.core_type = #tpu.core_type<tc>, window_params = [{transform_indices = @transform_0, window_bounds = array<i64: 2, 16, 4>}, {pipeline_mode = #tpu.pipeline_mode<synchronous>, transform_indices = @transform_1, window_bounds = array<i64: 3, 4, 128>}, {pipeline_mode = #tpu.pipeline_mode<synchronous>, transform_indices = @transform_2, window_bounds = array<i64: 1, 128>}, {pipeline_mode = #tpu.pipeline_mode<synchronous>, transform_indices = @transform_3, window_bounds = array<i64: 3, 128, 128>}, {pipeline_mode = #tpu.pipeline_mode<synchronous>, transform_indices = @transform_4, window_bounds = array<i64: 1, 128>}, {transform_indices = @transform_5, window_bounds = array<i64: 2, 8, 8>}]} {
    %cst = arith.constant 0.000000e+00 : f32
    %0 = vector.broadcast %cst : f32 to vector<2x1x4xf32>
    %c0 = arith.constant 0 : index
    %c0_0 = arith.constant 0 : index
    %c0_1 = arith.constant 0 : index
    %1 = vector.load %arg7[%c0, %c0_0, %c0_1] : memref<2x18x4xf32, #tpu.memory_space<vmem>>, vector<2x1x4xf32>
    tpu.vector_store %arg7[%c0, %c0_0, %c0_1], %0 {strides = array<i32>} : memref<2x18x4xf32, #tpu.memory_space<vmem>>, vector<2x1x4xf32>,
    %c0_2 = arith.constant 0 : index
    %c17 = arith.constant 17 : index
    %c0_3 = arith.constant 0 : index
    %2 = vector.load %arg7[%c0_2, %c17, %c0_3] : memref<2x18x4xf32, #tpu.memory_space<vmem>>, vector<2x1x4xf32>
    tpu.vector_store %arg7[%c0_2, %c17, %c0_3], %0 {strides = array<i32>} : memref<2x18x4xf32, #tpu.memory_space<vmem>>, vector<2x1x4xf32>,
    %c0_4 = arith.constant 0 : index
    %c0_5 = arith.constant 0 : index
    %c0_6 = arith.constant 0 : index
    %3 = vector.load %arg1[%c0_4, %c0_5, %c0_6] : memref<2x16x4xf32, #tpu.memory_space<vmem>>, vector<2x16x4xf32>
    %c0_7 = arith.constant 0 : index
    %c1 = arith.constant 1 : index
    %c0_8 = arith.constant 0 : index
    %4 = vector.load %arg7[%c0_7, %c1, %c0_8] : memref<2x18x4xf32, #tpu.memory_space<vmem>>, vector<2x16x4xf32>
    tpu.vector_store %arg7[%c0_7, %c1, %c0_8], %3 {strides = array<i32>} : memref<2x18x4xf32, #tpu.memory_space<vmem>>, vector<2x16x4xf32>,
    %c0_9 = arith.constant 0 : index
    %c0_10 = arith.constant 0 : index
    %c0_11 = arith.constant 0 : index
    %5 = tpu.strided_load %arg7[%c0_9, %c0_10, %c0_11] {strides = array<i32: 1, 2, 1>} : memref<2x18x4xf32, #tpu.memory_space<vmem>>, vector<2x8x4xf32>
    %6 = vector.shape_cast %5 : vector<2x8x4xf32> to vector<16x4xf32>
    %c0_12 = arith.constant 0 : index
    %c0_13 = arith.constant 0 : index
    %c0_14 = arith.constant 0 : index
    %7 = vector.load %arg2[%c0_12, %c0_13, %c0_14] : memref<3x4x128xf32, #tpu.memory_space<vmem>>, vector<1x4x128xf32>
    %8 = vector.shape_cast %7 : vector<1x4x128xf32> to vector<4x128xf32>
    %cst_15 = arith.constant dense<0.000000e+00> : vector<16x128xf32>
    %9 = tpu.matmul %6, %8, %cst_15 {dimension_numbers = #tpu.dot_dimension_numbers<[1], [0], [0], [1], [0, 0, 1, 1], [], []>} : vector<16x4xf32>, vector<4x128xf32>, vector<16x128xf32> -> vector<16x128xf32>
    %c0_16 = arith.constant 0 : index
    %c1_17 = arith.constant 1 : index
    %c0_18 = arith.constant 0 : index
    %10 = tpu.strided_load %arg7[%c0_16, %c1_17, %c0_18] {strides = array<i32: 1, 2, 1>} : memref<2x18x4xf32, #tpu.memory_space<vmem>>, vector<2x8x4xf32>
    %11 = vector.shape_cast %10 : vector<2x8x4xf32> to vector<16x4xf32>
    %c1_19 = arith.constant 1 : index
    %c0_20 = arith.constant 0 : index
    %c0_21 = arith.constant 0 : index
    %12 = vector.load %arg2[%c1_19, %c0_20, %c0_21] : memref<3x4x128xf32, #tpu.memory_space<vmem>>, vector<1x4x128xf32>
    %13 = vector.shape_cast %12 : vector<1x4x128xf32> to vector<4x128xf32>
    %cst_22 = arith.constant dense<0.000000e+00> : vector<16x128xf32>
    %14 = tpu.matmul %11, %13, %cst_22 {dimension_numbers = #tpu.dot_dimension_numbers<[1], [0], [0], [1], [0, 0, 1, 1], [], []>} : vector<16x4xf32>, vector<4x128xf32>, vector<16x128xf32> -> vector<16x128xf32>
    %15 = arith.addf %9, %14 : vector<16x128xf32>
    %c0_23 = arith.constant 0 : index
    %c2 = arith.constant 2 : index
    %c0_24 = arith.constant 0 : index
    %16 = tpu.strided_load %arg7[%c0_23, %c2, %c0_24] {strides = array<i32: 1, 2, 1>} : memref<2x18x4xf32, #tpu.memory_space<vmem>>, vector<2x8x4xf32>
    %17 = vector.shape_cast %16 : vector<2x8x4xf32> to vector<16x4xf32>
    %c2_25 = arith.constant 2 : index
    %c0_26 = arith.constant 0 : index
    %c0_27 = arith.constant 0 : index
    %18 = vector.load %arg2[%c2_25, %c0_26, %c0_27] : memref<3x4x128xf32, #tpu.memory_space<vmem>>, vector<1x4x128xf32>
    %19 = vector.shape_cast %18 : vector<1x4x128xf32> to vector<4x128xf32>
    %cst_28 = arith.constant dense<0.000000e+00> : vector<16x128xf32>
    %20 = tpu.matmul %17, %19, %cst_28 {dimension_numbers = #tpu.dot_dimension_numbers<[1], [0], [0], [1], [0, 0, 1, 1], [], []>} : vector<16x4xf32>, vector<4x128xf32>, vector<16x128xf32> -> vector<16x128xf32>
    %21 = arith.addf %15, %20 : vector<16x128xf32>
    %c0_29 = arith.constant 0 : index
    %c0_30 = arith.constant 0 : index
    %22 = vector.load %arg3[%c0_29, %c0_30] : memref<1x128xf32, #tpu.memory_space<vmem>>, vector<1x128xf32>
    %23 = vector.broadcast %22 : vector<1x128xf32> to vector<16x128xf32>
    %24 = arith.addf %21, %23 : vector<16x128xf32>
    %cst_31 = arith.constant 0.000000e+00 : f32
    %25 = vector.broadcast %cst_31 : f32 to vector<16x128xf32>
    %26 = arith.maximumf %24, %25 : vector<16x128xf32>
    %27 = vector.shape_cast %26 : vector<16x128xf32> to vector<2x8x128xf32>
    %cst_32 = arith.constant 0.000000e+00 : f32
    %28 = vector.broadcast %cst_32 : f32 to vector<2x1x128xf32>
    %c0_33 = arith.constant 0 : index
    %c0_34 = arith.constant 0 : index
    %c0_35 = arith.constant 0 : index
    %29 = vector.load %arg8[%c0_33, %c0_34, %c0_35] : memref<2x10x128xf32, #tpu.memory_space<vmem>>, vector<2x1x128xf32>
    tpu.vector_store %arg8[%c0_33, %c0_34, %c0_35], %28 {strides = array<i32>} : memref<2x10x128xf32, #tpu.memory_space<vmem>>, vector<2x1x128xf32>,
    %c0_36 = arith.constant 0 : index
    %c9 = arith.constant 9 : index
    %c0_37 = arith.constant 0 : index
    %30 = vector.load %arg8[%c0_36, %c9, %c0_37] : memref<2x10x128xf32, #tpu.memory_space<vmem>>, vector<2x1x128xf32>
    tpu.vector_store %arg8[%c0_36, %c9, %c0_37], %28 {strides = array<i32>} : memref<2x10x128xf32, #tpu.memory_space<vmem>>, vector<2x1x128xf32>,
    %c0_38 = arith.constant 0 : index
    %c1_39 = arith.constant 1 : index
    %c0_40 = arith.constant 0 : index
    %31 = vector.load %arg8[%c0_38, %c1_39, %c0_40] : memref<2x10x128xf32, #tpu.memory_space<vmem>>, vector<2x8x128xf32>
    tpu.vector_store %arg8[%c0_38, %c1_39, %c0_40], %27 {strides = array<i32>} : memref<2x10x128xf32, #tpu.memory_space<vmem>>, vector<2x8x128xf32>,
    %c0_41 = arith.constant 0 : index
    %c0_42 = arith.constant 0 : index
    %c0_43 = arith.constant 0 : index
    %32 = vector.load %arg8[%c0_41, %c0_42, %c0_43] : memref<2x10x128xf32, #tpu.memory_space<vmem>>, vector<2x8x128xf32>
    %33 = vector.shape_cast %32 : vector<2x8x128xf32> to vector<16x128xf32>
    %c0_44 = arith.constant 0 : index
    %c0_45 = arith.constant 0 : index
    %c0_46 = arith.constant 0 : index
    %34 = vector.load %arg4[%c0_44, %c0_45, %c0_46] : memref<3x128x128xf32, #tpu.memory_space<vmem>>, vector<1x128x128xf32>
    %35 = vector.shape_cast %34 : vector<1x128x128xf32> to vector<128x128xf32>
    %cst_47 = arith.constant dense<0.000000e+00> : vector<16x128xf32>
    %36 = tpu.matmul %33, %35, %cst_47 {dimension_numbers = #tpu.dot_dimension_numbers<[1], [0], [0], [1], [0, 0, 1, 1], [], []>} : vector<16x128xf32>, vector<128x128xf32>, vector<16x128xf32> -> vector<16x128xf32>
    %c0_48 = arith.constant 0 : index
    %c1_49 = arith.constant 1 : index
    %c0_50 = arith.constant 0 : index
    %37 = vector.load %arg8[%c0_48, %c1_49, %c0_50] : memref<2x10x128xf32, #tpu.memory_space<vmem>>, vector<2x8x128xf32>
    %38 = vector.shape_cast %37 : vector<2x8x128xf32> to vector<16x128xf32>
    %c1_51 = arith.constant 1 : index
    %c0_52 = arith.constant 0 : index
    %c0_53 = arith.constant 0 : index
    %39 = vector.load %arg4[%c1_51, %c0_52, %c0_53] : memref<3x128x128xf32, #tpu.memory_space<vmem>>, vector<1x128x128xf32>
    %40 = vector.shape_cast %39 : vector<1x128x128xf32> to vector<128x128xf32>
    %cst_54 = arith.constant dense<0.000000e+00> : vector<16x128xf32>
    %41 = tpu.matmul %38, %40, %cst_54 {dimension_numbers = #tpu.dot_dimension_numbers<[1], [0], [0], [1], [0, 0, 1, 1], [], []>} : vector<16x128xf32>, vector<128x128xf32>, vector<16x128xf32> -> vector<16x128xf32>
    %42 = arith.addf %36, %41 : vector<16x128xf32>
    %c0_55 = arith.constant 0 : index
    %c2_56 = arith.constant 2 : index
    %c0_57 = arith.constant 0 : index
    %43 = vector.load %arg8[%c0_55, %c2_56, %c0_57] : memref<2x10x128xf32, #tpu.memory_space<vmem>>, vector<2x8x128xf32>
    %44 = vector.shape_cast %43 : vector<2x8x128xf32> to vector<16x128xf32>
    %c2_58 = arith.constant 2 : index
    %c0_59 = arith.constant 0 : index
    %c0_60 = arith.constant 0 : index
    %45 = vector.load %arg4[%c2_58, %c0_59, %c0_60] : memref<3x128x128xf32, #tpu.memory_space<vmem>>, vector<1x128x128xf32>
    %46 = vector.shape_cast %45 : vector<1x128x128xf32> to vector<128x128xf32>
    %cst_61 = arith.constant dense<0.000000e+00> : vector<16x128xf32>
    %47 = tpu.matmul %44, %46, %cst_61 {dimension_numbers = #tpu.dot_dimension_numbers<[1], [0], [0], [1], [0, 0, 1, 1], [], []>} : vector<16x128xf32>, vector<128x128xf32>, vector<16x128xf32> -> vector<16x128xf32>
    %48 = arith.addf %42, %47 : vector<16x128xf32>
    %c0_62 = arith.constant 0 : index
    %c0_63 = arith.constant 0 : index
    %49 = vector.load %arg5[%c0_62, %c0_63] : memref<1x128xf32, #tpu.memory_space<vmem>>, vector<1x128xf32>
    %50 = vector.broadcast %49 : vector<1x128xf32> to vector<16x128xf32>
    %51 = arith.addf %48, %50 : vector<16x128xf32>
    %cst_64 = arith.constant 0.000000e+00 : f32
    %52 = vector.broadcast %cst_64 : f32 to vector<16x128xf32>
    %53 = arith.maximumf %51, %52 : vector<16x128xf32>
    %54 = vector.shape_cast %53 : vector<16x128xf32> to vector<2x8x128xf32>
    %55 = vector.extract_strided_slice %54 {offsets = [0, 0, 0], sizes = [2, 8, 8], strides = [1, 1, 1]} : vector<2x8x128xf32> to vector<2x8x8xf32>
    %c0_65 = arith.constant 0 : index
    %c0_66 = arith.constant 0 : index
    %c0_67 = arith.constant 0 : index
    %56 = vector.load %arg6[%c0_65, %c0_66, %c0_67] : memref<2x8x8xf32, #tpu.memory_space<vmem>>, vector<2x8x8xf32>
    tpu.vector_store %arg6[%c0_65, %c0_66, %c0_67], %55 {strides = array<i32>} : memref<2x8x8xf32, #tpu.memory_space<vmem>>, vector<2x8x8xf32>,
    return
  }
  func.func @transform_0(%arg0: i32) -> (i32, i32, i32) {
    %c0_i32 = arith.constant 0 : i32
    %c0_i32_0 = arith.constant 0 : i32
    %c0_i32_1 = arith.constant 0 : i32
    return %arg0, %c0_i32, %c0_i32_0 : i32, i32, i32
  }
  func.func @transform_1(%arg0: i32) -> (i32, i32, i32) {
    %c0_i32 = arith.constant 0 : i32
    %c0_i32_0 = arith.constant 0 : i32
    %c0_i32_1 = arith.constant 0 : i32
    %c0_i32_2 = arith.constant 0 : i32
    return %c0_i32, %c0_i32_0, %c0_i32_1 : i32, i32, i32
  }
  func.func @transform_2(%arg0: i32) -> (i32, i32) {
    %c0_i32 = arith.constant 0 : i32
    %c0_i32_0 = arith.constant 0 : i32
    %c0_i32_1 = arith.constant 0 : i32
    return %c0_i32, %c0_i32_0 : i32, i32
  }
  func.func @transform_3(%arg0: i32) -> (i32, i32, i32) {
    %c0_i32 = arith.constant 0 : i32
    %c0_i32_0 = arith.constant 0 : i32
    %c0_i32_1 = arith.constant 0 : i32
    %c0_i32_2 = arith.constant 0 : i32
    return %c0_i32, %c0_i32_0, %c0_i32_1 : i32, i32, i32
  }
  func.func @transform_4(%arg0: i32) -> (i32, i32) {
    %c0_i32 = arith.constant 0 : i32
    %c0_i32_0 = arith.constant 0 : i32
    %c0_i32_1 = arith.constant 0 : i32
    return %c0_i32, %c0_i32_0 : i32, i32
  }
  func.func @transform_5(%arg0: i32) -> (i32, i32, i32) {
    %c0_i32 = arith.constant 0 : i32
    %c0_i32_0 = arith.constant 0 : i32
    %c0_i32_1 = arith.constant 0 : i32
    return %arg0, %c0_i32, %c0_i32_0 : i32, i32, i32
  }
}

</mosaic_0001>

<llo_original>
// kernel: tpu_custom_call.1
$region0: #{tpu_custom_call.1}
  #allocation0 [shape = 'u32[]', space=smem, size = 0x4, offset = 0x4, fixed_abs, tag = 'smem constant byte address 0x4 - core index']
  #allocation1 [shape = 'u32[144,128]{1,0:T(1,128)}', space=vmem, size = 0x12000, scoped, tag = 'internal scratch']
  #allocation2 [shape = 'f32[2,18,4]{2,1,0:T(8,128)}', space=vmem, size = 0x6000, scoped, tag = 'scratch operand']
  #allocation3 [shape = 'f32[2,10,128]{2,1,0:T(8,128)}', space=vmem, size = 0x4000, scoped, tag = 'scratch operand']
  #allocation4 [shape = 'f32[2,10,128]{2,1,0:T(8,128)}', space=vmem, size = 0x4000, scoped, tag = 'scratch operand']
  %s0 = inlined_call_operand.vmem [shape: f32[2,16,4], index: 0, kind: input, shape index: {}]
  %s1 = inlined_call_operand.vmem [shape: f32[3,4,128], index: 1, kind: input, shape index: {}]
  %s2 = inlined_call_operand.vmem [shape: f32[1,128], index: 2, kind: input, shape index: {}]
  %s3 = inlined_call_operand.hbm [shape: f32[3,128,128], index: 3, kind: input, shape index: {}]
  %s4 = inlined_call_operand.vmem [shape: f32[1,128], index: 4, kind: input, shape index: {}]
  %s5 = inlined_call_operand.hbm [shape: f32[2,8,8], index: 5, kind: output, shape index: {}]
  %s6 = sld [smem:[#allocation0]]
  $region34: #{tpu_custom_call.1} parent=0
    _
  %s8 = ssub.s32 1, %s6
  %s9 = scalar_select 0, %s8, %s6
  $region1: #{tpu_custom_call.1} parent=0
    #allocation5 [shape = 'u8[196608]{0}', space=vmem, size = 0x30000, scoped, tag = 'input window, operand 3, single buffered']
    #allocation6 [shape = 's32[1]{0}', space=sflag, size = 0x4, scoped, tag = 'scoped memory for tpu_custom_call.1']
    #allocation7 [shape = 's32[1]{0}', space=sflag, size = 0x4, scoped, tag = 'scoped memory for tpu_custom_call.1']
    #allocation8 [shape = 'u8[8192]{0}', space=vmem, size = 0x2000, scoped, tag = 'output window, operand 0, single buffered']
    %10 = vsyncpa [#allocation6], 0
    %11 = vsyncpa [#allocation7], 0
    // Predicated region
    $region2: #{tpu_custom_call.1} parent=1 // pred_check
      _
    $region3: #{tpu_custom_call.1} parent=1 // pred_check_branch
      %13 = sbr.rel (0) target = $region5
    $region4: #{tpu_custom_call.1} parent=1 // pred_region
      _
    $region5: #{tpu_custom_call.1} parent=1 // pred_fallthru
      _
    // Predicated region
    $region6: #{tpu_custom_call.1} parent=1 // pred_check
      _
    $region7: #{tpu_custom_call.1} parent=1 // pred_check_branch
      %15 = sbr.rel (0) target = $region9
    $region8: #{tpu_custom_call.1} parent=1 // pred_region
      _
    $region9: #{tpu_custom_call.1} parent=1 // pred_fallthru
      _
    // Predicated region
    $region10: #{tpu_custom_call.1} parent=1 // pred_check
      _
    $region11: #{tpu_custom_call.1} parent=1 // pred_check_branch
      %17 = sbr.rel (0) target = $region13
    $region12: #{tpu_custom_call.1} parent=1 // pred_region
      _
    $region13: #{tpu_custom_call.1} parent=1 // pred_fallthru
      _
    // Predicated region
    $region14: #{tpu_custom_call.1} parent=1 // pred_check
      _
    $region15: #{tpu_custom_call.1} parent=1 // pred_check_branch
      %19 = sbr.rel (0) target = $region17
    $region16: #{tpu_custom_call.1} parent=1 // pred_region
      %s21 = ssub.s32 6144, 6144
      %22 = vsyncadd [#allocation6], %s21
      %s23 = sshll.u32 [#allocation5], 4
      %s24 = int_to_ptr.vmem [resolvable:$true] %s23
      %29 = dma.hbm_to_vmem [thread:$0]  %s3, 6144, %s24, [#allocation6], 128, 128, 8
    $region17: #{tpu_custom_call.1} parent=1 // pred_fallthru
      _
    // Predicated region
    $region18: #{tpu_custom_call.1} parent=1 // pred_check
      _
    $region19: #{tpu_custom_call.1} parent=1 // pred_check_branch
      %31 = sbr.rel (0) target = $region21
    $region20: #{tpu_custom_call.1} parent=1 // pred_region
      _
    $region21: #{tpu_custom_call.1} parent=1 // pred_fallthru
      _
    // Predicated region
    $region22: #{tpu_custom_call.1} parent=1 // pred_check
      _
    $region23: #{tpu_custom_call.1} parent=1 // pred_check_branch
      %33 = sbr.rel (0) target = $region25
    $region24: #{tpu_custom_call.1} parent=1 // pred_region
      %34 = dma.done [#allocation6], 6144
    $region25: #{tpu_custom_call.1} parent=1 // pred_fallthru
      _
    %vm35 = vcmask 24576
    %36 = vst.msk [vmem:[#allocation2] sm:$0x1] %vm35, 0.0
    %37 = vst.msk [vmem:[#allocation2 + $0x18] sm:$0x1] %vm35, 0.0
    %38 = vst.msk [vmem:[#allocation2 + $0x11] sm:$0x1] %vm35, 0.0
    %39 = vst.msk [vmem:[#allocation2 + $0x29] sm:$0x1] %vm35, 0.0
    %v40 = vld [vmem:[%s0] sm:$0xff]
    %v41 = vld [vmem:[%s0 + $0x8] sm:$0xff]
    %v42 = vld [vmem:[%s0 + $0x10] sm:$0xff]
    %v43 = vld [vmem:[%s0 + $0x18] sm:$0xff]
    %vm44 = vcmask 31744
    %45 = vst.msk [vmem:[#allocation2 + $0x1] sm:$0xff] %vm44, %v40
    %46 = vst.msk [vmem:[#allocation2 + $0x9] sm:$0xff] %vm44, %v41
    %47 = vst.msk [vmem:[#allocation2 + $0x19] sm:$0xff] %vm44, %v42
    %48 = vst.msk [vmem:[#allocation2 + $0x21] sm:$0xff] %vm44, %v43
    %v49 = vld [vmem:[#allocation2] ss:$2 sm:$0xff]
    %s50 = scalar_lea.vmem [#allocation2], 24
    %v51 = vld [vmem:[%s50] ss:$2 sm:$0xff]
    %v52 = vld [vmem:[%s1] sm:$0xf]
    %s53 = scalar_lea.vmem [#allocation2], 1
    %v54 = vld [vmem:[%s53] ss:$2 sm:$0xff]
    %s55 = scalar_lea.vmem [#allocation2], 25
    %v56 = vld [vmem:[%s55] ss:$2 sm:$0xff]
    %s57 = scalar_lea.vmem %s1, 4
    %v58 = vld [vmem:[%s57] sm:$0xf]
    %v60 = vsel %vm44, %v54, 0
    %v63 = vsel %vm44, %v56, 0
    %vm65 = vcmask 1043456
    %v67 = vsel %vm65, %v58, 0
    %69 = vmatprep.subr.mxu0 0.0
    %70 = vmatpush1.msra.mxu0 %v67
    %71 = vmatprep.subr.mxu0 0.0
    %72 = vmatpush1.msra.mxu0 0.0
    %73 = vmatprep.subr.mxu0 0.0
    %74 = vmatpush1.msra.mxu0 0.0
    %75 = vmatprep.subr.mxu0 0.0
    %76 = vmatpush1.msra.mxu0 0.0
    %77 = vmatprep.subr.mxu0 0.0
    %78 = vmatpush1.msra.mxu0 0.0
    %79 = vmatprep.subr.mxu0 0.0
    %80 = vmatpush1.msra.mxu0 0.0
    %81 = vmatprep.subr.mxu0 0.0
    %82 = vmatpush1.msra.mxu0 0.0
    %83 = vmatprep.subr.mxu0 0.0
    %84 = vmatpush1.msra.mxu0 0.0
    %85 = vmatprep.subr.mxu0 0.0
    %86 = vmatpush1.msra.mxu0 0.0
    %87 = vmatprep.subr.mxu0 0.0
    %88 = vmatpush1.msra.mxu0 0.0
    %89 = vmatprep.subr.mxu0 0.0
    %90 = vmatpush1.msra.mxu0 0.0
    %91 = vmatprep.subr.mxu0 0.0
    %92 = vmatpush1.msra.mxu0 0.0
    %93 = vmatprep.subr.mxu0 0.0
    %94 = vmatpush1.msra.mxu0 0.0
    %95 = vmatprep.subr.mxu0 0.0
    %96 = vmatpush1.msra.mxu0 0.0
    %97 = vmatprep.subr.mxu0 0.0
    %98 = vmatpush1.msra.mxu0 0.0
    %99 = vmatprep.subr.mxu0 0.0
    %100 = vmatpush1.msra.mxu0 0.0
    %101 = vmatprep.subr.mxu0 0.0
    %102 = vmatpush1.msra.mxu0 0.0
    %103 = vmatprep.subr.mxu0 0.0
    %104 = vmatpush1.msra.mxu0 0.0
    %105 = vmatprep.subr.mxu0 0.0
    %106 = vmatpush1.msra.mxu0 0.0
    %107 = vmatprep.subr.mxu0 0.0
    %108 = vmatpush1.msra.mxu0 0.0
    %109 = vmatprep.subr.mxu0 0.0
    %110 = vmatpush1.msra.mxu0 0.0
    %111 = vmatprep.subr.mxu0 0.0
    %112 = vmatpush1.msra.mxu0 0.0
    %113 = vmatprep.subr.mxu0 0.0
    %114 = vmatpush1.msra.mxu0 0.0
    %115 = vmatprep.subr.mxu0 0.0
    %116 = vmatpush1.msra.mxu0 0.0
    %117 = vmatprep.subr.mxu0 0.0
    %118 = vmatpush1.msra.mxu0 0.0
    %119 = vmatprep.subr.mxu0 0.0
    %120 = vmatpush1.msra.mxu0 0.0
    %121 = vmatprep.subr.mxu0 0.0
    %122 = vmatpush1.msra.mxu0 0.0
    %123 = vmatprep.subr.mxu0 0.0
    %124 = vmatpush1.msra.mxu0 0.0
    %125 = vmatprep.subr.mxu0 0.0
    %126 = vmatpush1.msra.mxu0 0.0
    %127 = vmatprep.subr.mxu0 0.0
    %128 = vmatpush1.msra.mxu0 0.0
    %129 = vmatprep.subr.mxu0 0.0
    %130 = vmatpush1.msra.mxu0 0.0
    %131 = vmatprep.subr.mxu0 0.0
    %132 = vmatpush1.msra.mxu0 0.0
    %133 = vmatprep.mubr.f32.mxu0 0.0
    %134 = vmatmul.mubr.f32.gmra.mrb[0].mxu0 %v60
    %v135 = vpop.f32.mrb[0].mxu0
    %v136 = vadd.f32 0.0, %v135
    %v137 = vpop.f32.mrb[0].mxu0
    %138 = vmatprep.mubr.f32.mxu0 0.0
    %139 = vmatmul.mubr.f32.gmra.mrb[0].mxu0 %v63
    %v140 = vpop.f32.mrb[0].mxu0
    %v141 = vadd.f32 0.0, %v140
    %v142 = vpop.f32.mrb[0].mxu0
    %143 = vdwg.mxu0
    %v145 = vsel %vm44, %v49, 0
    %v148 = vsel %vm44, %v51, 0
    %v151 = vsel %vm65, %v52, 0
    %153 = vmatprep.subr.mxu0 0.0
    %154 = vmatpush1.msra.mxu0 %v151
    %155 = vmatprep.subr.mxu0 0.0
    %156 = vmatpush1.msra.mxu0 0.0
    %157 = vmatprep.subr.mxu0 0.0
    %158 = vmatpush1.msra.mxu0 0.0
    %159 = vmatprep.subr.mxu0 0.0
    %160 = vmatpush1.msra.mxu0 0.0
    %161 = vmatprep.subr.mxu0 0.0
    %162 = vmatpush1.msra.mxu0 0.0
    %163 = vmatprep.subr.mxu0 0.0
    %164 = vmatpush1.msra.mxu0 0.0
    %165 = vmatprep.subr.mxu0 0.0
    %166 = vmatpush1.msra.mxu0 0.0
    %167 = vmatprep.subr.mxu0 0.0
    %168 = vmatpush1.msra.mxu0 0.0
    %169 = vmatprep.subr.mxu0 0.0
    %170 = vmatpush1.msra.mxu0 0.0
    %171 = vmatprep.subr.mxu0 0.0
    %172 = vmatpush1.msra.mxu0 0.0
    %173 = vmatprep.subr.mxu0 0.0
    %174 = vmatpush1.msra.mxu0 0.0
    %175 = vmatprep.subr.mxu0 0.0
    %176 = vmatpush1.msra.mxu0 0.0
    %177 = vmatprep.subr.mxu0 0.0
    %178 = vmatpush1.msra.mxu0 0.0
    %179 = vmatprep.subr.mxu0 0.0
    %180 = vmatpush1.msra.mxu0 0.0
    %181 = vmatprep.subr.mxu0 0.0
    %182 = vmatpush1.msra.mxu0 0.0
    %183 = vmatprep.subr.mxu0 0.0
    %184 = vmatpush1.msra.mxu0 0.0
    %185 = vmatprep.subr.mxu0 0.0
    %186 = vmatpush1.msra.mxu0 0.0
    %187 = vmatprep.subr.mxu0 0.0
    %188 = vmatpush1.msra.mxu0 0.0
    %189 = vmatprep.subr.mxu0 0.0
    %190 = vmatpush1.msra.mxu0 0.0
    %191 = vmatprep.subr.mxu0 0.0
    %192 = vmatpush1.msra.mxu0 0.0
    %193 = vmatprep.subr.mxu0 0.0
    %194 = vmatpush1.msra.mxu0 0.0
    %195 = vmatprep.subr.mxu0 0.0
    %196 = vmatpush1.msra.mxu0 0.0
    %197 = vmatprep.subr.mxu0 0.0
    %198 = vmatpush1.msra.mxu0 0.0
    %199 = vmatprep.subr.mxu0 0.0
    %200 = vmatpush1.msra.mxu0 0.0
    %201 = vmatprep.subr.mxu0 0.0
    %202 = vmatpush1.msra.mxu0 0.0
    %203 = vmatprep.subr.mxu0 0.0
    %204 = vmatpush1.msra.mxu0 0.0
    %205 = vmatprep.subr.mxu0 0.0
    %206 = vmatpush1.msra.mxu0 0.0
    %207 = vmatprep.subr.mxu0 0.0
    %208 = vmatpush1.msra.mxu0 0.0
    %209 = vmatprep.subr.mxu0 0.0
    %210 = vmatpush1.msra.mxu0 0.0
    %211 = vmatprep.subr.mxu0 0.0
    %212 = vmatpush1.msra.mxu0 0.0
    %213 = vmatprep.subr.mxu0 0.0
    %214 = vmatpush1.msra.mxu0 0.0
    %215 = vmatprep.subr.mxu0 0.0
    %216 = vmatpush1.msra.mxu0 0.0
    %217 = vmatprep.mubr.f32.mxu0 0.0
    %218 = vmatmul.mubr.f32.gmra.mrb[0].mxu0 %v145
    %v219 = vpop.f32.mrb[0].mxu0
    %v220 = vadd.f32 %v136, %v219
    %v221 = vpop.f32.mrb[0].mxu0
    %222 = vmatprep.mubr.f32.mxu0 0.0
    %223 = vmatmul.mubr.f32.gmra.mrb[0].mxu0 %v148
    %v224 = vpop.f32.mrb[0].mxu0
    %v225 = vadd.f32 %v141, %v224
    %v226 = vpop.f32.mrb[0].mxu0
    %227 = vdwg.mxu0
    %s228 = scalar_lea.vmem [#allocation2], 2
    %v229 = vld [vmem:[%s228] ss:$2 sm:$0xff]
    %s230 = scalar_lea.vmem [#allocation2], 26
    %v231 = vld [vmem:[%s230] ss:$2 sm:$0xff]
    %s232 = scalar_lea.vmem %s1, 8
    %v233 = vld [vmem:[%s232] sm:$0xf]
    %v235 = vsel %vm44, %v229, 0
    %v238 = vsel %vm44, %v231, 0
    %v241 = vsel %vm65, %v233, 0
    %243 = vmatprep.subr.mxu0 0.0
    %244 = vmatpush1.msra.mxu0 %v241
    %245 = vmatprep.subr.mxu0 0.0
    %246 = vmatpush1.msra.mxu0 0.0
    %247 = vmatprep.subr.mxu0 0.0
    %248 = vmatpush1.msra.mxu0 0.0
    %249 = vmatprep.subr.mxu0 0.0
    %250 = vmatpush1.msra.mxu0 0.0
    %251 = vmatprep.subr.mxu0 0.0
    %252 = vmatpush1.msra.mxu0 0.0
    %253 = vmatprep.subr.mxu0 0.0
    %254 = vmatpush1.msra.mxu0 0.0
    %255 = vmatprep.subr.mxu0 0.0
    %256 = vmatpush1.msra.mxu0 0.0
    %257 = vmatprep.subr.mxu0 0.0
    %258 = vmatpush1.msra.mxu0 0.0
    %259 = vmatprep.subr.mxu0 0.0
    %260 = vmatpush1.msra.mxu0 0.0
    %261 = vmatprep.subr.mxu0 0.0
    %262 = vmatpush1.msra.mxu0 0.0
    %263 = vmatprep.subr.mxu0 0.0
    %264 = vmatpush1.msra.mxu0 0.0
    %265 = vmatprep.subr.mxu0 0.0
    %266 = vmatpush1.msra.mxu0 0.0
    %267 = vmatprep.subr.mxu0 0.0
    %268 = vmatpush1.msra.mxu0 0.0
    %269 = vmatprep.subr.mxu0 0.0
    %270 = vmatpush1.msra.mxu0 0.0
    %271 = vmatprep.subr.mxu0 0.0
    %272 = vmatpush1.msra.mxu0 0.0
    %273 = vmatprep.subr.mxu0 0.0
    %274 = vmatpush1.msra.mxu0 0.0
    %275 = vmatprep.subr.mxu0 0.0
    %276 = vmatpush1.msra.mxu0 0.0
    %277 = vmatprep.subr.mxu0 0.0
    %278 = vmatpush1.msra.mxu0 0.0
    %279 = vmatprep.subr.mxu0 0.0
    %280 = vmatpush1.msra.mxu0 0.0
    %281 = vmatprep.subr.mxu0 0.0
    %282 = vmatpush1.msra.mxu0 0.0
    %283 = vmatprep.subr.mxu0 0.0
    %284 = vmatpush1.msra.mxu0 0.0
    %285 = vmatprep.subr.mxu0 0.0
    %286 = vmatpush1.msra.mxu0 0.0
    %287 = vmatprep.subr.mxu0 0.0
    %288 = vmatpush1.msra.mxu0 0.0
    %289 = vmatprep.subr.mxu0 0.0
    %290 = vmatpush1.msra.mxu0 0.0
    %291 = vmatprep.subr.mxu0 0.0
    %292 = vmatpush1.msra.mxu0 0.0
    %293 = vmatprep.subr.mxu0 0.0
    %294 = vmatpush1.msra.mxu0 0.0
    %295 = vmatprep.subr.mxu0 0.0
    %296 = vmatpush1.msra.mxu0 0.0
    %297 = vmatprep.subr.mxu0 0.0
    %298 = vmatpush1.msra.mxu0 0.0
    %299 = vmatprep.subr.mxu0 0.0
    %300 = vmatpush1.msra.mxu0 0.0
    %301 = vmatprep.subr.mxu0 0.0
    %302 = vmatpush1.msra.mxu0 0.0
    %303 = vmatprep.subr.mxu0 0.0
    %304 = vmatpush1.msra.mxu0 0.0
    %305 = vmatprep.subr.mxu0 0.0
    %306 = vmatpush1.msra.mxu0 0.0
    %307 = vmatprep.mubr.f32.mxu0 0.0
    %308 = vmatmul.mubr.f32.gmra.mrb[0].mxu0 %v235
    %v309 = vpop.f32.mrb[0].mxu0
    %v310 = vadd.f32 0.0, %v309
    %v311 = vpop.f32.mrb[0].mxu0
    %312 = vmatprep.mubr.f32.mxu0 0.0
    %313 = vmatmul.mubr.f32.gmra.mrb[0].mxu0 %v238
    %v314 = vpop.f32.mrb[0].mxu0
    %v315 = vadd.f32 0.0, %v314
    %v316 = vpop.f32.mrb[0].mxu0
    %317 = vdwg.mxu0
    %v318 = vadd.f32 %v220, %v310
    %v319 = vadd.f32 %v225, %v315
    %v320 = vld [vmem:[%s2] sm:$0x1]
    %v322 = vlaneseq
    %v323 = vshrl.u32 %v322, 7
    %v324 = vsub.s32 0, %v323
    %v325 = vrot.slane %v320, %v324
    %v327 = vadd.f32 %v318, %v325
    %v328 = vadd.f32 %v319, %v325
    %v329 = vmax.f32 %v327, 0.0
    %v330 = vmax.f32 %v328, 0.0
    %331 = vst [vmem:[#allocation3] sm:$0x1] 0.0
    %332 = vst [vmem:[#allocation3 + $0x10] sm:$0x1] 0.0
    %333 = vst [vmem:[#allocation3 + $0x9] sm:$0x1] 0.0
    %334 = vst [vmem:[#allocation3 + $0x19] sm:$0x1] 0.0
    %335 = vst [vmem:[#allocation3 + $0x1] sm:$0xff] %v329
    %336 = vst [vmem:[#allocation3 + $0x11] sm:$0xff] %v330
    %v337 = vld [vmem:[#allocation3] sm:$0xff]
    %v338 = vld [vmem:[#allocation3 + $0x10] sm:$0xff]
    %v339 = vld [vmem:[#allocation5] sm:$0xff]
    %v340 = vld [vmem:[#allocation5 + $0x8] sm:$0xff]
    %v341 = vld [vmem:[#allocation5 + $0x10] sm:$0xff]
    %v342 = vld [vmem:[#allocation5 + $0x18] sm:$0xff]
    %v343 = vld [vmem:[#allocation5 + $0x20] sm:$0xff]
    %v344 = vld [vmem:[#allocation5 + $0x28] sm:$0xff]
    %v345 = vld [vmem:[#allocation5 + $0x30] sm:$0xff]
    %v346 = vld [vmem:[#allocation5 + $0x38] sm:$0xff]
    %v347 = vld [vmem:[#allocation5 + $0x40] sm:$0xff]
    %v348 = vld [vmem:[#allocation5 + $0x48] sm:$0xff]
    %v349 = vld [vmem:[#allocation5 + $0x50] sm:$0xff]
    %v350 = vld [vmem:[#allocation5 + $0x58] sm:$0xff]
    %v351 = vld [vmem:[#allocation5 + $0x60] sm:$0xff]
    %v352 = vld [vmem:[#allocation5 + $0x68] sm:$0xff]
    %v353 = vld [vmem:[#allocation5 + $0x70] sm:$0xff]
    %v354 = vld [vmem:[#allocation5 + $0x78] sm:$0xff]
    %v355 = vld [vmem:[#allocation3 + $0x1] sm:$0xff]
    %v356 = vld [vmem:[#allocation3 + $0x11] sm:$0xff]
    %s357 = scalar_lea.vmem [#allocation5], 128
    %v358 = vld [vmem:[%s357] sm:$0xff]
    %v359 = vld [vmem:[%s357 + $0x8] sm:$0xff]
    %v360 = vld [vmem:[%s357 + $0x10] sm:$0xff]
    %v361 = vld [vmem:[%s357 + $0x18] sm:$0xff]
    %v362 = vld [vmem:[%s357 + $0x20] sm:$0xff]
    %v363 = vld [vmem:[%s357 + $0x28] sm:$0xff]
    %v364 = vld [vmem:[%s357 + $0x30] sm:$0xff]
    %v365 = vld [vmem:[%s357 + $0x38] sm:$0xff]
    %v366 = vld [vmem:[%s357 + $0x40] sm:$0xff]
    %v367 = vld [vmem:[%s357 + $0x48] sm:$0xff]
    %v368 = vld [vmem:[%s357 + $0x50] sm:$0xff]
    %v369 = vld [vmem:[%s357 + $0x58] sm:$0xff]
    %v370 = vld [vmem:[%s357 + $0x60] sm:$0xff]
    %v371 = vld [vmem:[%s357 + $0x68] sm:$0xff]
    %v372 = vld [vmem:[%s357 + $0x70] sm:$0xff]
    %v373 = vld [vmem:[%s357 + $0x78] sm:$0xff]
    %374 = vmatprep.subr.mxu0 0.0
    %375 = vmatpush1.msra.mxu0 %v358
    %376 = vmatprep.subr.mxu0 0.0
    %377 = vmatpush1.msra.mxu0 %v359
    %378 = vmatprep.subr.mxu0 0.0
    %379 = vmatpush1.msra.mxu0 %v360
    %380 = vmatprep.subr.mxu0 0.0
    %381 = vmatpush1.msra.mxu0 %v361
    %382 = vmatprep.subr.mxu0 0.0
    %383 = vmatpush1.msra.mxu0 %v362
    %384 = vmatprep.subr.mxu0 0.0
    %385 = vmatpush1.msra.mxu0 %v363
    %386 = vmatprep.subr.mxu0 0.0
    %387 = vmatpush1.msra.mxu0 %v364
    %388 = vmatprep.subr.mxu0 0.0
    %389 = vmatpush1.msra.mxu0 %v365
    %390 = vmatprep.subr.mxu0 0.0
    %391 = vmatpush1.msra.mxu0 %v366
    %392 = vmatprep.subr.mxu0 0.0
    %393 = vmatpush1.msra.mxu0 %v367
    %394 = vmatprep.subr.mxu0 0.0
    %395 = vmatpush1.msra.mxu0 %v368
    %396 = vmatprep.subr.mxu0 0.0
    %397 = vmatpush1.msra.mxu0 %v369
    %398 = vmatprep.subr.mxu0 0.0
    %399 = vmatpush1.msra.mxu0 %v370
    %400 = vmatprep.subr.mxu0 0.0
    %401 = vmatpush1.msra.mxu0 %v371
    %402 = vmatprep.subr.mxu0 0.0
    %403 = vmatpush1.msra.mxu0 %v372
    %404 = vmatprep.subr.mxu0 0.0
    %405 = vmatpush1.msra.mxu0 %v373
    %406 = vmatprep.subr.mxu0 0.0
    %407 = vmatpush1.msra.mxu0 0.0
    %408 = vmatprep.subr.mxu0 0.0
    %409 = vmatpush1.msra.mxu0 0.0
    %410 = vmatprep.subr.mxu0 0.0
    %411 = vmatpush1.msra.mxu0 0.0
    %412 = vmatprep.subr.mxu0 0.0
    %413 = vmatpush1.msra.mxu0 0.0
    %414 = vmatprep.subr.mxu0 0.0
    %415 = vmatpush1.msra.mxu0 0.0
    %416 = vmatprep.subr.mxu0 0.0
    %417 = vmatpush1.msra.mxu0 0.0
    %418 = vmatprep.subr.mxu0 0.0
    %419 = vmatpush1.msra.mxu0 0.0
    %420 = vmatprep.subr.mxu0 0.0
    %421 = vmatpush1.msra.mxu0 0.0
    %422 = vmatprep.subr.mxu0 0.0
    %423 = vmatpush1.msra.mxu0 0.0
    %424 = vmatprep.subr.mxu0 0.0
    %425 = vmatpush1.msra.mxu0 0.0
    %426 = vmatprep.subr.mxu0 0.0
    %427 = vmatpush1.msra.mxu0 0.0
    %428 = vmatprep.subr.mxu0 0.0
    %429 = vmatpush1.msra.mxu0 0.0
    %430 = vmatprep.subr.mxu0 0.0
    %431 = vmatpush1.msra.mxu0 0.0
    %432 = vmatprep.subr.mxu0 0.0
    %433 = vmatpush1.msra.mxu0 0.0
    %434 = vmatprep.subr.mxu0 0.0
    %435 = vmatpush1.msra.mxu0 0.0
    %436 = vmatprep.subr.mxu0 0.0
    %437 = vmatpush1.msra.mxu0 0.0
    %438 = vmatprep.mubr.f32.mxu0 0.0
    %439 = vmatmul.mubr.f32.gmra.mrb[0].mxu0 %v355
    %v440 = vpop.f32.mrb[0].mxu0
    %v441 = vadd.f32 0.0, %v440
    %v442 = vpop.f32.mrb[0].mxu0
    %443 = vmatprep.mubr.f32.mxu0 0.0
    %444 = vmatmul.mubr.f32.gmra.mrb[0].mxu0 %v356
    %v445 = vpop.f32.mrb[0].mxu0
    %v446 = vadd.f32 0.0, %v445
    %v447 = vpop.f32.mrb[0].mxu0
    %448 = vdwg.mxu0
    %449 = vmatprep.subr.mxu0 0.0
    %450 = vmatpush1.msra.mxu0 %v339
    %451 = vmatprep.subr.mxu0 0.0
    %452 = vmatpush1.msra.mxu0 %v340
    %453 = vmatprep.subr.mxu0 0.0
    %454 = vmatpush1.msra.mxu0 %v341
    %455 = vmatprep.subr.mxu0 0.0
    %456 = vmatpush1.msra.mxu0 %v342
    %457 = vmatprep.subr.mxu0 0.0
    %458 = vmatpush1.msra.mxu0 %v343
    %459 = vmatprep.subr.mxu0 0.0
    %460 = vmatpush1.msra.mxu0 %v344
    %461 = vmatprep.subr.mxu0 0.0
    %462 = vmatpush1.msra.mxu0 %v345
    %463 = vmatprep.subr.mxu0 0.0
    %464 = vmatpush1.msra.mxu0 %v346
    %465 = vmatprep.subr.mxu0 0.0
    %466 = vmatpush1.msra.mxu0 %v347
    %467 = vmatprep.subr.mxu0 0.0
    %468 = vmatpush1.msra.mxu0 %v348
    %469 = vmatprep.subr.mxu0 0.0
    %470 = vmatpush1.msra.mxu0 %v349
    %471 = vmatprep.subr.mxu0 0.0
    %472 = vmatpush1.msra.mxu0 %v350
    %473 = vmatprep.subr.mxu0 0.0
    %474 = vmatpush1.msra.mxu0 %v351
    %475 = vmatprep.subr.mxu0 0.0
    %476 = vmatpush1.msra.mxu0 %v352
    %477 = vmatprep.subr.mxu0 0.0
    %478 = vmatpush1.msra.mxu0 %v353
    %479 = vmatprep.subr.mxu0 0.0
    %480 = vmatpush1.msra.mxu0 %v354
    %481 = vmatprep.subr.mxu0 0.0
    %482 = vmatpush1.msra.mxu0 0.0
    %483 = vmatprep.subr.mxu0 0.0
    %484 = vmatpush1.msra.mxu0 0.0
    %485 = vmatprep.subr.mxu0 0.0
    %486 = vmatpush1.msra.mxu0 0.0
    %487 = vmatprep.subr.mxu0 0.0
    %488 = vmatpush1.msra.mxu0 0.0
    %489 = vmatprep.subr.mxu0 0.0
    %490 = vmatpush1.msra.mxu0 0.0
    %491 = vmatprep.subr.mxu0 0.0
    %492 = vmatpush1.msra.mxu0 0.0
    %493 = vmatprep.subr.mxu0 0.0
    %494 = vmatpush1.msra.mxu0 0.0
    %495 = vmatprep.subr.mxu0 0.0
    %496 = vmatpush1.msra.mxu0 0.0
    %497 = vmatprep.subr.mxu0 0.0
    %498 = vmatpush1.msra.mxu0 0.0
    %499 = vmatprep.subr.mxu0 0.0
    %500 = vmatpush1.msra.mxu0 0.0
    %501 = vmatprep.subr.mxu0 0.0
    %502 = vmatpush1.msra.mxu0 0.0
    %503 = vmatprep.subr.mxu0 0.0
    %504 = vmatpush1.msra.mxu0 0.0
    %505 = vmatprep.subr.mxu0 0.0
    %506 = vmatpush1.msra.mxu0 0.0
    %507 = vmatprep.subr.mxu0 0.0
    %508 = vmatpush1.msra.mxu0 0.0
    %509 = vmatprep.subr.mxu0 0.0
    %510 = vmatpush1.msra.mxu0 0.0
    %511 = vmatprep.subr.mxu0 0.0
    %512 = vmatpush1.msra.mxu0 0.0
    %513 = vmatprep.mubr.f32.mxu0 0.0
    %514 = vmatmul.mubr.f32.gmra.mrb[0].mxu0 %v337
    %v515 = vpop.f32.mrb[0].mxu0
    %v516 = vadd.f32 %v441, %v515
    %v517 = vpop.f32.mrb[0].mxu0
    %518 = vmatprep.mubr.f32.mxu0 0.0
    %519 = vmatmul.mubr.f32.gmra.mrb[0].mxu0 %v338
    %v520 = vpop.f32.mrb[0].mxu0
    %v521 = vadd.f32 %v446, %v520
    %v522 = vpop.f32.mrb[0].mxu0
    %523 = vdwg.mxu0
    %v524 = vld [vmem:[#allocation3 + $0x2] sm:$0xff]
    %v525 = vld [vmem:[#allocation3 + $0x12] sm:$0xff]
    %s526 = scalar_lea.vmem [#allocation5], 256
    %v527 = vld [vmem:[%s526] sm:$0xff]
    %v528 = vld [vmem:[%s526 + $0x8] sm:$0xff]
    %v529 = vld [vmem:[%s526 + $0x10] sm:$0xff]
    %v530 = vld [vmem:[%s526 + $0x18] sm:$0xff]
    %v531 = vld [vmem:[%s526 + $0x20] sm:$0xff]
    %v532 = vld [vmem:[%s526 + $0x28] sm:$0xff]
    %v533 = vld [vmem:[%s526 + $0x30] sm:$0xff]
    %v534 = vld [vmem:[%s526 + $0x38] sm:$0xff]
    %v535 = vld [vmem:[%s526 + $0x40] sm:$0xff]
    %v536 = vld [vmem:[%s526 + $0x48] sm:$0xff]
    %v537 = vld [vmem:[%s526 + $0x50] sm:$0xff]
    %v538 = vld [vmem:[%s526 + $0x58] sm:$0xff]
    %v539 = vld [vmem:[%s526 + $0x60] sm:$0xff]
    %v540 = vld [vmem:[%s526 + $0x68] sm:$0xff]
    %v541 = vld [vmem:[%s526 + $0x70] sm:$0xff]
    %v542 = vld [vmem:[%s526 + $0x78] sm:$0xff]
    %543 = vmatprep.subr.mxu0 0.0
    %544 = vmatpush1.msra.mxu0 %v527
    %545 = vmatprep.subr.mxu0 0.0
    %546 = vmatpush1.msra.mxu0 %v528
    %547 = vmatprep.subr.mxu0 0.0
    %548 = vmatpush1.msra.mxu0 %v529
    %549 = vmatprep.subr.mxu0 0.0
    %550 = vmatpush1.msra.mxu0 %v530
    %551 = vmatprep.subr.mxu0 0.0
    %552 = vmatpush1.msra.mxu0 %v531
    %553 = vmatprep.subr.mxu0 0.0
    %554 = vmatpush1.msra.mxu0 %v532
    %555 = vmatprep.subr.mxu0 0.0
    %556 = vmatpush1.msra.mxu0 %v533
    %557 = vmatprep.subr.mxu0 0.0
    %558 = vmatpush1.msra.mxu0 %v534
    %559 = vmatprep.subr.mxu0 0.0
    %560 = vmatpush1.msra.mxu0 %v535
    %561 = vmatprep.subr.mxu0 0.0
    %562 = vmatpush1.msra.mxu0 %v536
    %563 = vmatprep.subr.mxu0 0.0
    %564 = vmatpush1.msra.mxu0 %v537
    %565 = vmatprep.subr.mxu0 0.0
    %566 = vmatpush1.msra.mxu0 %v538
    %567 = vmatprep.subr.mxu0 0.0
    %568 = vmatpush1.msra.mxu0 %v539
    %569 = vmatprep.subr.mxu0 0.0
    %570 = vmatpush1.msra.mxu0 %v540
    %571 = vmatprep.subr.mxu0 0.0
    %572 = vmatpush1.msra.mxu0 %v541
    %573 = vmatprep.subr.mxu0 0.0
    %574 = vmatpush1.msra.mxu0 %v542
    %575 = vmatprep.subr.mxu0 0.0
    %576 = vmatpush1.msra.mxu0 0.0
    %577 = vmatprep.subr.mxu0 0.0
    %578 = vmatpush1.msra.mxu0 0.0
    %579 = vmatprep.subr.mxu0 0.0
    %580 = vmatpush1.msra.mxu0 0.0
    %581 = vmatprep.subr.mxu0 0.0
    %582 = vmatpush1.msra.mxu0 0.0
    %583 = vmatprep.subr.mxu0 0.0
    %584 = vmatpush1.msra.mxu0 0.0
    %585 = vmatprep.subr.mxu0 0.0
    %586 = vmatpush1.msra.mxu0 0.0
    %587 = vmatprep.subr.mxu0 0.0
    %588 = vmatpush1.msra.mxu0 0.0
    %589 = vmatprep.subr.mxu0 0.0
    %590 = vmatpush1.msra.mxu0 0.0
    %591 = vmatprep.subr.mxu0 0.0
    %592 = vmatpush1.msra.mxu0 0.0
    %593 = vmatprep.subr.mxu0 0.0
    %594 = vmatpush1.msra.mxu0 0.0
    %595 = vmatprep.subr.mxu0 0.0
    %596 = vmatpush1.msra.mxu0 0.0
    %597 = vmatprep.subr.mxu0 0.0
    %598 = vmatpush1.msra.mxu0 0.0
    %599 = vmatprep.subr.mxu0 0.0
    %600 = vmatpush1.msra.mxu0 0.0
    %601 = vmatprep.subr.mxu0 0.0
    %602 = vmatpush1.msra.mxu0 0.0
    %603 = vmatprep.subr.mxu0 0.0
    %604 = vmatpush1.msra.mxu0 0.0
    %605 = vmatprep.subr.mxu0 0.0
    %606 = vmatpush1.msra.mxu0 0.0
    %607 = vmatprep.mubr.f32.mxu0 0.0
    %608 = vmatmul.mubr.f32.gmra.mrb[0].mxu0 %v524
    %v609 = vpop.f32.mrb[0].mxu0
    %v610 = vadd.f32 0.0, %v609
    %v611 = vpop.f32.mrb[0].mxu0
    %612 = vmatprep.mubr.f32.mxu0 0.0
    %613 = vmatmul.mubr.f32.gmra.mrb[0].mxu0 %v525
    %v614 = vpop.f32.mrb[0].mxu0
    %v615 = vadd.f32 0.0, %v614
    %v616 = vpop.f32.mrb[0].mxu0
    %617 = vdwg.mxu0
    %v618 = vadd.f32 %v516, %v610
    %v619 = vadd.f32 %v521, %v615
    %v620 = vld [vmem:[%s4] sm:$0x1]
    %v622 = vlaneseq
    %v623 = vshrl.u32 %v622, 7
    %v624 = vsub.s32 0, %v623
    %v625 = vrot.slane %v620, %v624
    %v627 = vadd.f32 %v618, %v625
    %v628 = vadd.f32 %v619, %v625
    %v629 = vmax.f32 %v627, 0.0
    %v630 = vmax.f32 %v628, 0.0
    %vm631 = vcmask 64512
    %632 = vst.msk [vmem:[#allocation8] sm:$0xff] %vm631, %v629
    %633 = vst.msk [vmem:[#allocation8 + $0x8] sm:$0xff] %vm631, %v630
    // Predicated region
    $region26: #{tpu_custom_call.1} parent=1 // pred_check
      _
    $region27: #{tpu_custom_call.1} parent=1 // pred_check_branch
      %635 = sbr.rel (0) target = $region29
    $region28: #{tpu_custom_call.1} parent=1 // pred_region
      %s637 = ssub.s32 256, 256
      %638 = vsyncadd [#allocation7], %s637
      %s639 = sshll.u32 [#allocation8], 4
      %s640 = int_to_ptr.vmem [resolvable:$true] %s639
      %645 = dma.vmem_to_hbm [thread:$0]  %s640, 256, %s5, [#allocation7], 128, 128, 8
    $region29: #{tpu_custom_call.1} parent=1 // pred_fallthru
      _
    // Predicated region
    $region30: #{tpu_custom_call.1} parent=1 // pred_check
      _
    $region31: #{tpu_custom_call.1} parent=1 // pred_check_branch
      %647 = sbr.rel (0) target = $region33
    $region32: #{tpu_custom_call.1} parent=1 // pred_region
      %648 = dma.done [#allocation7], 256
    $region33: #{tpu_custom_call.1} parent=1 // pred_fallthru
      _
    %649 = vsyncpa [#allocation6], 1
    %650 = vsyncpa [#allocation7], 1

</llo_original>
